<compile_context>
chip_gen: v7x
topology: tpu7x:2x2x1
jax: 0.10.0
libtpu: 0.0.40
codegen_flags: <defaults>
</compile_context>

<pallas_src>
import functools

import jax
import jax.numpy as jnp
from jax.experimental import pallas as pl
from jax.experimental.pallas import tpu as pltpu


# ----------------------------------------------------------------------------
# Helpers
# ----------------------------------------------------------------------------
def _round_up(n, m):
    return ((n + m - 1) // m) * m


def _pad_axis(a, target, axis):
    pad = target - a.shape[axis]
    if pad <= 0:
        return a
    widths = [(0, 0)] * a.ndim
    widths[axis] = (0, pad)
    return jnp.pad(a, widths)


def _apply_activation(h, act_code, leak_val):
    # act_code is a static (trace-time) Python string, mirroring the PyTorch
    # forward()'s branch on actFunctCode.
    if act_code == "SIGM":
        return jax.nn.sigmoid(h)
    elif act_code == "RELU":
        return jnp.maximum(h, 0.0)
    elif act_code == "LRELU":
        return jnp.where(h >= 0.0, h, leak_val * h)
    elif act_code == "TANH":
        return jnp.tanh(h)
    else:
        raise ValueError(f"Invalid activation code [{act_code}]")


# ----------------------------------------------------------------------------
# Kernel
# ----------------------------------------------------------------------------
def _regressor1_kernel(x_ref, w1_ref, b1_ref, w2_ref, b2_ref, out_ref,
                       *, act_code, leak_val, use_bf16):
    x = x_ref[...]                          # (TB, In_p)  f32
    w1 = w1_ref[...]                        # (In_p, H_p) f32 or bf16
    w2 = w2_ref[...]                        # (H_p, Out_p) f32 or bf16

    if use_bf16:
        # bf16 operands for the MXU (native path on v6e/v7x); f32 accumulate.
        h = jnp.dot(x.astype(jnp.bfloat16), w1,
                    preferred_element_type=jnp.float32)
    else:
        h = jnp.dot(x, w1, preferred_element_type=jnp.float32)

    # Bias add + activation stay in f32 (VPU/EUP work; v5e has no bf16 VPU).
    h = h + b1_ref[...]                     # (1, H_p) broadcast over TB rows
    h = _apply_activation(h, act_code, leak_val)

    if use_bf16:
        out = jnp.dot(h.astype(jnp.bfloat16), w2,
                      preferred_element_type=jnp.float32)
    else:
        out = jnp.dot(h, w2, preferred_element_type=jnp.float32)

    out = out + b2_ref[...]                 # (1, Out_p)
    out_ref[...] = out.astype(out_ref.dtype)


# ----------------------------------------------------------------------------
# Wrapper
# ----------------------------------------------------------------------------
def regressor1_forward(x, params, act_code, leak_val=0.01,
                       *, use_bf16=False, block_batch=128):
    """Fused Pallas forward pass of Regressor1.

    x:        (B, inputSize) float32
    params:   dict with w1 (In, H), b1 (H,), w2 (H, Out), b2 (Out,)
    act_code: one of 'SIGM', 'RELU', 'LRELU', 'TANH' (static).
    use_bf16: cast matmul operands to bf16 (f32 accumulation) for the MXU
              fast path on v6e/v7x.  Elementwise math stays f32.
    """
    w1, b1, w2, b2 = params["w1"], params["b1"], params["w2"], params["b2"]
    B, In = x.shape
    H = w1.shape[1]
    Out = w2.shape[1]

    # ---- lane-dense padding of feature dims, batch padded to tile multiple.
    In_p = _round_up(In, 128)
    H_p = _round_up(H, 128)
    Out_p = _round_up(Out, 128)

    TB = min(block_batch, _round_up(B, 8))   # batch tile, multiple of 8
    TB = _round_up(TB, 8)
    B_p = _round_up(B, TB)
    n_blocks = B_p // TB

    x_p = _pad_axis(_pad_axis(x, B_p, 0), In_p, 1)
    w1_p = _pad_axis(_pad_axis(w1, In_p, 0), H_p, 1)
    b1_p = _pad_axis(b1.reshape(1, H), H_p, 1)
    w2_p = _pad_axis(_pad_axis(w2, H_p, 0), Out_p, 1)   # padded rows are zero
    b2_p = _pad_axis(b2.reshape(1, Out), Out_p, 1)

    if use_bf16:
        # Pre-convert static weights: halves HBM->VMEM DMA bytes.
        w1_p = w1_p.astype(jnp.bfloat16)
        w2_p = w2_p.astype(jnp.bfloat16)

    kernel = functools.partial(
        _regressor1_kernel,
        act_code=act_code, leak_val=leak_val, use_bf16=use_bf16,
    )

    # Advisory cost estimate (helps XLA schedule the custom call).
    flops = 2 * B_p * (In_p * H_p + H_p * Out_p)
    transcendentals = B_p * H_p if act_code in ("SIGM", "TANH") else 0
    bytes_accessed = int(
        x_p.size * x_p.dtype.itemsize
        + w1_p.size * w1_p.dtype.itemsize
        + b1_p.size * b1_p.dtype.itemsize
        + w2_p.size * w2_p.dtype.itemsize
        + b2_p.size * b2_p.dtype.itemsize
        + B_p * Out_p * x.dtype.itemsize
    )

    out_p = pl.pallas_call(
        kernel,
        out_shape=jax.ShapeDtypeStruct((B_p, Out_p), x.dtype),
        grid_spec=pltpu.PrefetchScalarGridSpec(
            num_scalar_prefetch=0,
            grid=(n_blocks,),
            in_specs=[
                # x: batch-tiled (double-buffered / pipelined over the grid)
                pl.BlockSpec((TB, In_p), lambda i: (i, 0)),
                # weights / biases: constant block index -> VMEM-resident
                pl.BlockSpec((In_p, H_p), lambda i: (0, 0)),
                pl.BlockSpec((1, H_p), lambda i: (0, 0)),
                pl.BlockSpec((H_p, Out_p), lambda i: (0, 0)),
                pl.BlockSpec((1, Out_p), lambda i: (0, 0)),
            ],
            out_specs=pl.BlockSpec((TB, Out_p), lambda i: (i, 0)),
        ),
        compiler_params=pltpu.CompilerParams(
            dimension_semantics=("parallel",),   # megacore split on v7x
        ),
        cost_estimate=pl.CostEstimate(
            flops=flops,
            transcendentals=transcendentals,
            bytes_accessed=bytes_accessed,
        ),
    )(x_p, w1_p, b1_p, w2_p, b2_p)

    # Strip the padding outside the kernel.
    return out_p[:B, :Out]


# ----------------------------------------------------------------------------
# PyTorch-nn.Linear-style init (weights stored as (in, out) = W^T of PyTorch)
# ----------------------------------------------------------------------------
def init_regressor1_params(key, input_size, hidden_sizes, output_size):
    h = hidden_sizes[0]
    k1, k2, k3, k4 = jax.random.split(key, 4)
    bound1 = 1.0 / jnp.sqrt(input_size)
    bound2 = 1.0 / jnp.sqrt(h)
    return {
        "w1": jax.random.uniform(k1, (input_size, h), jnp.float32,
                                 -bound1, bound1),
        "b1": jax.random.uniform(k2, (h,), jnp.float32, -bound1, bound1),
        "w2": jax.random.uniform(k3, (h, output_size), jnp.float32,
                                 -bound2, bound2),
        "b2": jax.random.uniform(k4, (output_size,), jnp.float32,
                                 -bound2, bound2),
    }


# ----------------------------------------------------------------------------
# Self-test
# ----------------------------------------------------------------------------
if __name__ == "__main__":
    # Small shapes consistent with the module: x (batch, inputSize),
    # hiddenSizes = [32], outputSize = 4.
    batch, input_size, hidden, output_size = 8, 16, 32, 4

    key = jax.random.PRNGKey(0)
    kp, kx = jax.random.split(key)
    params = init_regressor1_params(kp, input_size, [hidden], output_size)
    x = jax.random.normal(kx, (batch, input_size), jnp.float32)

    def reference(x, params, code, leak=0.01):
        h = x @ params["w1"] + params["b1"]
        h = _apply_activation(h, code, leak)
        return h @ params["w2"] + params["b2"]

    ok = True

    # f32 path — every activation branch, tight tolerance.
    for code in ("SIGM", "RELU", "LRELU", "TANH"):
        out = jax.block_until_ready(regressor1_forward(x, params, code))
        ref = reference(x, params, code)
        assert out.shape == (batch, output_size)
        if not jnp.allclose(out, ref, atol=1e-5, rtol=1e-5):
            ok = False

    # bf16-operand MXU path (v6e/v7x fast path) — f32 accumulation, looser tol.
    out_bf16 = jax.block_until_ready(
        regressor1_forward(x, params, "TANH", use_bf16=True))
    ref = reference(x, params, "TANH")
    if not jnp.allclose(out_bf16, ref, atol=2e-2, rtol=2e-2):
        ok = False

    # Larger batch to exercise the multi-step, pipelined batch grid.
    x_big = jax.random.normal(jax.random.PRNGKey(1), (300, input_size),
                              jnp.float32)
    out_big = jax.block_until_ready(
        regressor1_forward(x_big, params, "LRELU"))
    ref_big = reference(x_big, params, "LRELU")
    assert out_big.shape == (300, output_size)
    if not jnp.allclose(out_big, ref_big, atol=1e-5, rtol=1e-5):
        ok = False

    if ok:
        print("KERNEL_OK")
</pallas_src>

<mosaic_0001>
module attributes {stable_mosaic.version = 11 : i64} {
  func.func @_regressor1_kernel(%arg0: i32, %arg1: memref<8x128xf32, #tpu.memory_space<vmem>>, %arg2: memref<128x128xf32, #tpu.memory_space<vmem>>, %arg3: memref<1x128xf32, #tpu.memory_space<vmem>>, %arg4: memref<128x128xf32, #tpu.memory_space<vmem>>, %arg5: memref<1x128xf32, #tpu.memory_space<vmem>>, %arg6: memref<8x128xf32, #tpu.memory_space<vmem>>) attributes {dimension_semantics = [#tpu.dimension_semantics<parallel>], iteration_bounds = array<i64: 1>, scalar_prefetch = 0 : i64, scratch_operands = 0 : i64, tpu.core_type = #tpu.core_type<tc>, window_params = [{transform_indices = @transform_0, window_bounds = array<i64: 8, 128>}, {pipeline_mode = #tpu.pipeline_mode<synchronous>, transform_indices = @transform_1, window_bounds = array<i64: 128, 128>}, {pipeline_mode = #tpu.pipeline_mode<synchronous>, transform_indices = @transform_2, window_bounds = array<i64: 1, 128>}, {pipeline_mode = #tpu.pipeline_mode<synchronous>, transform_indices = @transform_3, window_bounds = array<i64: 128, 128>}, {pipeline_mode = #tpu.pipeline_mode<synchronous>, transform_indices = @transform_4, window_bounds = array<i64: 1, 128>}, {transform_indices = @transform_5, window_bounds = array<i64: 8, 128>}]} {
    %c0 = arith.constant 0 : index
    %c0_0 = arith.constant 0 : index
    %0 = vector.load %arg1[%c0, %c0_0] : memref<8x128xf32, #tpu.memory_space<vmem>>, vector<8x128xf32>
    %c0_1 = arith.constant 0 : index
    %c0_2 = arith.constant 0 : index
    %1 = vector.load %arg2[%c0_1, %c0_2] : memref<128x128xf32, #tpu.memory_space<vmem>>, vector<128x128xf32>
    %c0_3 = arith.constant 0 : index
    %c0_4 = arith.constant 0 : index
    %2 = vector.load %arg4[%c0_3, %c0_4] : memref<128x128xf32, #tpu.memory_space<vmem>>, vector<128x128xf32>
    %cst = arith.constant dense<0.000000e+00> : vector<8x128xf32>
    %3 = tpu.matmul %0, %1, %cst {dimension_numbers = #tpu.dot_dimension_numbers<[1], [0], [0], [1], [0, 0, 1, 1], [], []>} : vector<8x128xf32>, vector<128x128xf32>, vector<8x128xf32> -> vector<8x128xf32>
    %c0_5 = arith.constant 0 : index
    %c0_6 = arith.constant 0 : index
    %4 = vector.load %arg3[%c0_5, %c0_6] : memref<1x128xf32, #tpu.memory_space<vmem>>, vector<1x128xf32>
    %5 = vector.broadcast %4 : vector<1x128xf32> to vector<8x128xf32>
    %6 = arith.addf %3, %5 : vector<8x128xf32>
    %7 = arith.negf %6 : vector<8x128xf32>
    %8 = math.exp %7 : vector<8x128xf32>
    %cst_7 = arith.constant 1.000000e+00 : f32
    %9 = vector.broadcast %cst_7 : f32 to vector<8x128xf32>
    %10 = arith.addf %9, %8 : vector<8x128xf32>
    %11 = arith.divf %9, %10 : vector<8x128xf32>
    %cst_8 = arith.constant dense<0.000000e+00> : vector<8x128xf32>
    %12 = tpu.matmul %11, %2, %cst_8 {dimension_numbers = #tpu.dot_dimension_numbers<[1], [0], [0], [1], [0, 0, 1, 1], [], []>} : vector<8x128xf32>, vector<128x128xf32>, vector<8x128xf32> -> vector<8x128xf32>
    %c0_9 = arith.constant 0 : index
    %c0_10 = arith.constant 0 : index
    %13 = vector.load %arg5[%c0_9, %c0_10] : memref<1x128xf32, #tpu.memory_space<vmem>>, vector<1x128xf32>
    %14 = vector.broadcast %13 : vector<1x128xf32> to vector<8x128xf32>
    %15 = arith.addf %12, %14 : vector<8x128xf32>
    %c0_11 = arith.constant 0 : index
    %c0_12 = arith.constant 0 : index
    %16 = vector.load %arg6[%c0_11, %c0_12] : memref<8x128xf32, #tpu.memory_space<vmem>>, vector<8x128xf32>
    tpu.vector_store %arg6[%c0_11, %c0_12], %15 {strides = array<i32>} : memref<8x128xf32, #tpu.memory_space<vmem>>, vector<8x128xf32>,
    return
  }
  func.func @transform_0(%arg0: i32) -> (i32, i32) {
    %c0_i32 = arith.constant 0 : i32
    %c0_i32_0 = arith.constant 0 : i32
    return %arg0, %c0_i32 : i32, i32
  }
  func.func @transform_1(%arg0: i32) -> (i32, i32) {
    %c0_i32 = arith.constant 0 : i32
    %c0_i32_0 = arith.constant 0 : i32
    %c0_i32_1 = arith.constant 0 : i32
    return %c0_i32, %c0_i32_0 : i32, i32
  }
  func.func @transform_2(%arg0: i32) -> (i32, i32) {
    %c0_i32 = arith.constant 0 : i32
    %c0_i32_0 = arith.constant 0 : i32
    %c0_i32_1 = arith.constant 0 : i32
    return %c0_i32, %c0_i32_0 : i32, i32
  }
  func.func @transform_3(%arg0: i32) -> (i32, i32) {
    %c0_i32 = arith.constant 0 : i32
    %c0_i32_0 = arith.constant 0 : i32
    %c0_i32_1 = arith.constant 0 : i32
    return %c0_i32, %c0_i32_0 : i32, i32
  }
  func.func @transform_4(%arg0: i32) -> (i32, i32) {
    %c0_i32 = arith.constant 0 : i32
    %c0_i32_0 = arith.constant 0 : i32
    %c0_i32_1 = arith.constant 0 : i32
    return %c0_i32, %c0_i32_0 : i32, i32
  }
  func.func @transform_5(%arg0: i32) -> (i32, i32) {
    %c0_i32 = arith.constant 0 : i32
    %c0_i32_0 = arith.constant 0 : i32
    return %arg0, %c0_i32 : i32, i32
  }
}

</mosaic_0001>

<llo_original>
// kernel: tpu_custom_call.1
$region0: #{tpu_custom_call.1}
  #allocation0 [shape = 'u32[]', space=smem, size = 0x4, offset = 0x4, fixed_abs, tag = 'smem constant byte address 0x4 - core index']
  #allocation1 [shape = 'u32[144,128]{1,0:T(1,128)}', space=vmem, size = 0x12000, scoped, tag = 'internal scratch']
  %s0 = inlined_call_operand.hbm [shape: f32[8,128], index: 0, kind: input, shape index: {}]
  %s1 = inlined_call_operand.hbm [shape: f32[128,128], index: 1, kind: input, shape index: {}]
  %s2 = inlined_call_operand.vmem [shape: f32[1,128], index: 2, kind: input, shape index: {}]
  %s3 = inlined_call_operand.hbm [shape: f32[128,128], index: 3, kind: input, shape index: {}]
  %s4 = inlined_call_operand.vmem [shape: f32[1,128], index: 4, kind: input, shape index: {}]
  %s5 = inlined_call_operand.hbm [shape: f32[8,128], index: 5, kind: output, shape index: {}]
  %s6 = sld [smem:[#allocation0]]
  $region42: #{tpu_custom_call.1} parent=0
    _
  %s8 = ssub.s32 1, %s6
  %s9 = scalar_select 0, %s8, %s6
  $region1: #{tpu_custom_call.1} parent=0
    #allocation2 [shape = 'u8[4096]{0}', space=vmem, size = 0x1000, scoped, tag = 'input window, operand 0, single buffered']
    #allocation3 [shape = 's32[1]{0}', space=sflag, size = 0x4, scoped, tag = 'scoped memory for tpu_custom_call.1']
    #allocation4 [shape = 's32[1]{0}', space=sflag, size = 0x4, scoped, tag = 'scoped memory for tpu_custom_call.1']
    #allocation5 [shape = 'u8[65536]{0}', space=vmem, size = 0x10000, scoped, tag = 'input window, operand 1, single buffered']
    #allocation6 [shape = 's32[1]{0}', space=sflag, size = 0x4, scoped, tag = 'scoped memory for tpu_custom_call.1']
    #allocation7 [shape = 'u8[65536]{0}', space=vmem, size = 0x10000, scoped, tag = 'input window, operand 3, single buffered']
    #allocation8 [shape = 'u8[4096]{0}', space=vmem, size = 0x1000, scoped, tag = 'output window, operand 0, single buffered']
    %10 = vsyncpa [#allocation3], 0
    %11 = vsyncpa [#allocation6], 0
    %12 = vsyncpa [#allocation4], 0
    // Predicated region
    $region2: #{tpu_custom_call.1} parent=1 // pred_check
      _
    $region3: #{tpu_custom_call.1} parent=1 // pred_check_branch
      %14 = sbr.rel (0) target = $region5
    $region4: #{tpu_custom_call.1} parent=1 // pred_region
      %s16 = ssub.s32 128, 128
      %17 = vsyncadd [#allocation3], %s16
      %s19 = sshll.u32 [#allocation2], 4
      %s20 = int_to_ptr.vmem [resolvable:$true] %s19
      %22 = dma.hbm_to_vmem [thread:$0]  %s0, 128, %s20, [#allocation3]
    $region5: #{tpu_custom_call.1} parent=1 // pred_fallthru
      _
    // Predicated region
    $region6: #{tpu_custom_call.1} parent=1 // pred_check
      _
    $region7: #{tpu_custom_call.1} parent=1 // pred_check_branch
      %24 = sbr.rel (0) target = $region9
    $region8: #{tpu_custom_call.1} parent=1 // pred_region
      %s26 = ssub.s32 2048, 2048
      %27 = vsyncadd [#allocation6], %s26
      %s28 = sshll.u32 [#allocation5], 4
      %s29 = int_to_ptr.vmem [resolvable:$true] %s28
      %34 = dma.hbm_to_vmem [thread:$0]  %s1, 2048, %s29, [#allocation6], 128, 128, 8
    $region9: #{tpu_custom_call.1} parent=1 // pred_fallthru
      _
    // Predicated region
    $region10: #{tpu_custom_call.1} parent=1 // pred_check
      _
    $region11: #{tpu_custom_call.1} parent=1 // pred_check_branch
      %36 = sbr.rel (0) target = $region13
    $region12: #{tpu_custom_call.1} parent=1 // pred_region
      _
    $region13: #{tpu_custom_call.1} parent=1 // pred_fallthru
      _
    // Predicated region
    $region14: #{tpu_custom_call.1} parent=1 // pred_check
      _
    $region15: #{tpu_custom_call.1} parent=1 // pred_check_branch
      %38 = sbr.rel (0) target = $region17
    $region16: #{tpu_custom_call.1} parent=1 // pred_region
      %s40 = ssub.s32 2048, 2048
      %41 = vsyncadd [#allocation6], %s40
      %s42 = sshll.u32 [#allocation7], 4
      %s43 = int_to_ptr.vmem [resolvable:$true] %s42
      %48 = dma.hbm_to_vmem [thread:$0]  %s3, 2048, %s43, [#allocation6], 128, 128, 8
    $region17: #{tpu_custom_call.1} parent=1 // pred_fallthru
      _
    // Predicated region
    $region18: #{tpu_custom_call.1} parent=1 // pred_check
      _
    $region19: #{tpu_custom_call.1} parent=1 // pred_check_branch
      %50 = sbr.rel (0) target = $region21
    $region20: #{tpu_custom_call.1} parent=1 // pred_region
      _
    $region21: #{tpu_custom_call.1} parent=1 // pred_fallthru
      _
    // Predicated region
    $region22: #{tpu_custom_call.1} parent=1 // pred_check
      _
    $region23: #{tpu_custom_call.1} parent=1 // pred_check_branch
      %52 = sbr.rel (0) target = $region25
    $region24: #{tpu_custom_call.1} parent=1 // pred_region
      %53 = dma.done [#allocation3], 128
    $region25: #{tpu_custom_call.1} parent=1 // pred_fallthru
      _
    // Predicated region
    $region26: #{tpu_custom_call.1} parent=1 // pred_check
      _
    $region27: #{tpu_custom_call.1} parent=1 // pred_check_branch
      %55 = sbr.rel (0) target = $region29
    $region28: #{tpu_custom_call.1} parent=1 // pred_region
      %56 = dma.done [#allocation6], 2048
    $region29: #{tpu_custom_call.1} parent=1 // pred_fallthru
      _
    // Predicated region
    $region30: #{tpu_custom_call.1} parent=1 // pred_check
      _
    $region31: #{tpu_custom_call.1} parent=1 // pred_check_branch
      %58 = sbr.rel (0) target = $region33
    $region32: #{tpu_custom_call.1} parent=1 // pred_region
      %59 = dma.done [#allocation6], 2048
    $region33: #{tpu_custom_call.1} parent=1 // pred_fallthru
      _
    %v60 = vld [vmem:[#allocation2] sm:$0xff]
    %v61 = vld [vmem:[#allocation5] sm:$0xff]
    %v62 = vld [vmem:[#allocation5 + $0x8] sm:$0xff]
    %v63 = vld [vmem:[#allocation5 + $0x10] sm:$0xff]
    %v64 = vld [vmem:[#allocation5 + $0x18] sm:$0xff]
    %v65 = vld [vmem:[#allocation5 + $0x20] sm:$0xff]
    %v66 = vld [vmem:[#allocation5 + $0x28] sm:$0xff]
    %v67 = vld [vmem:[#allocation5 + $0x30] sm:$0xff]
    %v68 = vld [vmem:[#allocation5 + $0x38] sm:$0xff]
    %v69 = vld [vmem:[#allocation5 + $0x40] sm:$0xff]
    %v70 = vld [vmem:[#allocation5 + $0x48] sm:$0xff]
    %v71 = vld [vmem:[#allocation5 + $0x50] sm:$0xff]
    %v72 = vld [vmem:[#allocation5 + $0x58] sm:$0xff]
    %v73 = vld [vmem:[#allocation5 + $0x60] sm:$0xff]
    %v74 = vld [vmem:[#allocation5 + $0x68] sm:$0xff]
    %v75 = vld [vmem:[#allocation5 + $0x70] sm:$0xff]
    %v76 = vld [vmem:[#allocation5 + $0x78] sm:$0xff]
    %v77 = vld [vmem:[#allocation7] sm:$0xff]
    %v78 = vld [vmem:[#allocation7 + $0x8] sm:$0xff]
    %v79 = vld [vmem:[#allocation7 + $0x10] sm:$0xff]
    %v80 = vld [vmem:[#allocation7 + $0x18] sm:$0xff]
    %v81 = vld [vmem:[#allocation7 + $0x20] sm:$0xff]
    %v82 = vld [vmem:[#allocation7 + $0x28] sm:$0xff]
    %v83 = vld [vmem:[#allocation7 + $0x30] sm:$0xff]
    %v84 = vld [vmem:[#allocation7 + $0x38] sm:$0xff]
    %v85 = vld [vmem:[#allocation7 + $0x40] sm:$0xff]
    %v86 = vld [vmem:[#allocation7 + $0x48] sm:$0xff]
    %v87 = vld [vmem:[#allocation7 + $0x50] sm:$0xff]
    %v88 = vld [vmem:[#allocation7 + $0x58] sm:$0xff]
    %v89 = vld [vmem:[#allocation7 + $0x60] sm:$0xff]
    %v90 = vld [vmem:[#allocation7 + $0x68] sm:$0xff]
    %v91 = vld [vmem:[#allocation7 + $0x70] sm:$0xff]
    %v92 = vld [vmem:[#allocation7 + $0x78] sm:$0xff]
    %v93 = vld [vmem:[%s2] sm:$0x1]
    %v95 = vlaneseq
    %v96 = vshrl.u32 %v95, 7
    %v97 = vsub.s32 0, %v96
    %v98 = vrot.slane %v93, %v97
    %100 = vmatprep.subr.mxu0 0.0
    %101 = vmatpush1.msra.mxu0 %v61
    %102 = vmatprep.subr.mxu0 0.0
    %103 = vmatpush1.msra.mxu0 %v62
    %104 = vmatprep.subr.mxu0 0.0
    %105 = vmatpush1.msra.mxu0 %v63
    %106 = vmatprep.subr.mxu0 0.0
    %107 = vmatpush1.msra.mxu0 %v64
    %108 = vmatprep.subr.mxu0 0.0
    %109 = vmatpush1.msra.mxu0 %v65
    %110 = vmatprep.subr.mxu0 0.0
    %111 = vmatpush1.msra.mxu0 %v66
    %112 = vmatprep.subr.mxu0 0.0
    %113 = vmatpush1.msra.mxu0 %v67
    %114 = vmatprep.subr.mxu0 0.0
    %115 = vmatpush1.msra.mxu0 %v68
    %116 = vmatprep.subr.mxu0 0.0
    %117 = vmatpush1.msra.mxu0 %v69
    %118 = vmatprep.subr.mxu0 0.0
    %119 = vmatpush1.msra.mxu0 %v70
    %120 = vmatprep.subr.mxu0 0.0
    %121 = vmatpush1.msra.mxu0 %v71
    %122 = vmatprep.subr.mxu0 0.0
    %123 = vmatpush1.msra.mxu0 %v72
    %124 = vmatprep.subr.mxu0 0.0
    %125 = vmatpush1.msra.mxu0 %v73
    %126 = vmatprep.subr.mxu0 0.0
    %127 = vmatpush1.msra.mxu0 %v74
    %128 = vmatprep.subr.mxu0 0.0
    %129 = vmatpush1.msra.mxu0 %v75
    %130 = vmatprep.subr.mxu0 0.0
    %131 = vmatpush1.msra.mxu0 %v76
    %132 = vmatprep.subr.mxu0 0.0
    %133 = vmatpush1.msra.mxu0 0.0
    %134 = vmatprep.subr.mxu0 0.0
    %135 = vmatpush1.msra.mxu0 0.0
    %136 = vmatprep.subr.mxu0 0.0
    %137 = vmatpush1.msra.mxu0 0.0
    %138 = vmatprep.subr.mxu0 0.0
    %139 = vmatpush1.msra.mxu0 0.0
    %140 = vmatprep.subr.mxu0 0.0
    %141 = vmatpush1.msra.mxu0 0.0
    %142 = vmatprep.subr.mxu0 0.0
    %143 = vmatpush1.msra.mxu0 0.0
    %144 = vmatprep.subr.mxu0 0.0
    %145 = vmatpush1.msra.mxu0 0.0
    %146 = vmatprep.subr.mxu0 0.0
    %147 = vmatpush1.msra.mxu0 0.0
    %148 = vmatprep.subr.mxu0 0.0
    %149 = vmatpush1.msra.mxu0 0.0
    %150 = vmatprep.subr.mxu0 0.0
    %151 = vmatpush1.msra.mxu0 0.0
    %152 = vmatprep.subr.mxu0 0.0
    %153 = vmatpush1.msra.mxu0 0.0
    %154 = vmatprep.subr.mxu0 0.0
    %155 = vmatpush1.msra.mxu0 0.0
    %156 = vmatprep.subr.mxu0 0.0
    %157 = vmatpush1.msra.mxu0 0.0
    %158 = vmatprep.subr.mxu0 0.0
    %159 = vmatpush1.msra.mxu0 0.0
    %160 = vmatprep.subr.mxu0 0.0
    %161 = vmatpush1.msra.mxu0 0.0
    %162 = vmatprep.subr.mxu0 0.0
    %163 = vmatpush1.msra.mxu0 0.0
    %164 = vmatprep.mubr.f32.mxu0 0.0
    %165 = vmatmul.mubr.f32.gmra.mrb[0].mxu0 %v60
    %v166 = vpop.f32.mrb[0].mxu0
    %v167 = vadd.f32 %v98, %v166
    %v168 = vpop.f32.mrb[0].mxu0
    %169 = vdwg.mxu0
    %v170 = vxor.u32 %v167, 2147483648
    %v171 = vmul.f32 %v170, 1.442695
    %v172 = vpow.pop %v171
    %v173 = vadd.f32 %v172, 1.0
    %v174 = vrcp.pop %v173
    %v175 = vmul.f32 1.0, %v174
    %v176 = vld [vmem:[%s4] sm:$0x1]
    %v178 = vlaneseq
    %v179 = vshrl.u32 %v178, 7
    %v180 = vsub.s32 0, %v179
    %v181 = vrot.slane %v176, %v180
    %183 = vmatprep.subr.mxu0 0.0
    %184 = vmatpush1.msra.mxu0 %v77
    %185 = vmatprep.subr.mxu0 0.0
    %186 = vmatpush1.msra.mxu0 %v78
    %187 = vmatprep.subr.mxu0 0.0
    %188 = vmatpush1.msra.mxu0 %v79
    %189 = vmatprep.subr.mxu0 0.0
    %190 = vmatpush1.msra.mxu0 %v80
    %191 = vmatprep.subr.mxu0 0.0
    %192 = vmatpush1.msra.mxu0 %v81
    %193 = vmatprep.subr.mxu0 0.0
    %194 = vmatpush1.msra.mxu0 %v82
    %195 = vmatprep.subr.mxu0 0.0
    %196 = vmatpush1.msra.mxu0 %v83
    %197 = vmatprep.subr.mxu0 0.0
    %198 = vmatpush1.msra.mxu0 %v84
    %199 = vmatprep.subr.mxu0 0.0
    %200 = vmatpush1.msra.mxu0 %v85
    %201 = vmatprep.subr.mxu0 0.0
    %202 = vmatpush1.msra.mxu0 %v86
    %203 = vmatprep.subr.mxu0 0.0
    %204 = vmatpush1.msra.mxu0 %v87
    %205 = vmatprep.subr.mxu0 0.0
    %206 = vmatpush1.msra.mxu0 %v88
    %207 = vmatprep.subr.mxu0 0.0
    %208 = vmatpush1.msra.mxu0 %v89
    %209 = vmatprep.subr.mxu0 0.0
    %210 = vmatpush1.msra.mxu0 %v90
    %211 = vmatprep.subr.mxu0 0.0
    %212 = vmatpush1.msra.mxu0 %v91
    %213 = vmatprep.subr.mxu0 0.0
    %214 = vmatpush1.msra.mxu0 %v92
    %215 = vmatprep.subr.mxu0 0.0
    %216 = vmatpush1.msra.mxu0 0.0
    %217 = vmatprep.subr.mxu0 0.0
    %218 = vmatpush1.msra.mxu0 0.0
    %219 = vmatprep.subr.mxu0 0.0
    %220 = vmatpush1.msra.mxu0 0.0
    %221 = vmatprep.subr.mxu0 0.0
    %222 = vmatpush1.msra.mxu0 0.0
    %223 = vmatprep.subr.mxu0 0.0
    %224 = vmatpush1.msra.mxu0 0.0
    %225 = vmatprep.subr.mxu0 0.0
    %226 = vmatpush1.msra.mxu0 0.0
    %227 = vmatprep.subr.mxu0 0.0
    %228 = vmatpush1.msra.mxu0 0.0
    %229 = vmatprep.subr.mxu0 0.0
    %230 = vmatpush1.msra.mxu0 0.0
    %231 = vmatprep.subr.mxu0 0.0
    %232 = vmatpush1.msra.mxu0 0.0
    %233 = vmatprep.subr.mxu0 0.0
    %234 = vmatpush1.msra.mxu0 0.0
    %235 = vmatprep.subr.mxu0 0.0
    %236 = vmatpush1.msra.mxu0 0.0
    %237 = vmatprep.subr.mxu0 0.0
    %238 = vmatpush1.msra.mxu0 0.0
    %239 = vmatprep.subr.mxu0 0.0
    %240 = vmatpush1.msra.mxu0 0.0
    %241 = vmatprep.subr.mxu0 0.0
    %242 = vmatpush1.msra.mxu0 0.0
    %243 = vmatprep.subr.mxu0 0.0
    %244 = vmatpush1.msra.mxu0 0.0
    %245 = vmatprep.subr.mxu0 0.0
    %246 = vmatpush1.msra.mxu0 0.0
    %247 = vmatprep.mubr.f32.mxu0 0.0
    %248 = vmatmul.mubr.f32.gmra.mrb[0].mxu0 %v175
    %v249 = vpop.f32.mrb[0].mxu0
    %v250 = vadd.f32 %v181, %v249
    %v251 = vpop.f32.mrb[0].mxu0
    %252 = vdwg.mxu0
    %253 = vst [vmem:[#allocation8] sm:$0xff] %v250
    // Predicated region
    $region34: #{tpu_custom_call.1} parent=1 // pred_check
      _
    $region35: #{tpu_custom_call.1} parent=1 // pred_check_branch
      %255 = sbr.rel (0) target = $region37
    $region36: #{tpu_custom_call.1} parent=1 // pred_region
      %s257 = ssub.s32 128, 128
      %258 = vsyncadd [#allocation4], %s257
      %s260 = sshll.u32 [#allocation8], 4
      %s261 = int_to_ptr.vmem [resolvable:$true] %s260
      %263 = dma.vmem_to_hbm [thread:$0]  %s261, 128, %s5, [#allocation4]
    $region37: #{tpu_custom_call.1} parent=1 // pred_fallthru
      _
    // Predicated region
    $region38: #{tpu_custom_call.1} parent=1 // pred_check
      _
    $region39: #{tpu_custom_call.1} parent=1 // pred_check_branch
      %265 = sbr.rel (0) target = $region41
    $region40: #{tpu_custom_call.1} parent=1 // pred_region
      %266 = dma.done [#allocation4], 128
    $region41: #{tpu_custom_call.1} parent=1 // pred_fallthru
      _
    %267 = vsyncpa [#allocation3], 1
    %268 = vsyncpa [#allocation6], 1
    %269 = vsyncpa [#allocation4], 1

</llo_original>
